<compile_context>
chip_gen: v7x
topology: tpu7x:2x2x1
jax: 0.10.0
libtpu: 0.0.40
codegen_flags: <defaults>
</compile_context>

<pallas_src>
import jax
import jax.numpy as jnp
from jax.experimental import pallas as pl
from jax.experimental.pallas import tpu as pltpu


def _ce_partial_kernel(pred_ref, target_ref, out_ref):
    """Partial cross-entropy numerator sum(t * log_softmax(p)) for one batch tile."""
    p = pred_ref[...].astype(jnp.float32)    # (TB, C)
    t = target_ref[...].astype(jnp.float32)  # (TB, C)

    # Numerically-stable log-softmax pieces along the class (lane) axis.
    m = jnp.max(p, axis=1, keepdims=True)                              # (TB, 1)
    shifted = p - m                                                    # (TB, C)
    lse = jnp.log(jnp.sum(jnp.exp(shifted), axis=1, keepdims=True))    # (TB, 1)

    # sum(t * (shifted - lse)) == sum(t * shifted) - sum(lse * sum_c(t))
    # -> avoids materializing a full (TB, C) logp temporary (less VPU work,
    #    less vreg pressure); per-row combine is O(TB) not O(TB*C).
    t_dot = jnp.sum(t * shifted)                          # scalar
    t_row = jnp.sum(t, axis=1, keepdims=True)             # (TB, 1)
    partial = t_dot - jnp.sum(lse * t_row)                # scalar

    # Lane-dense, unmasked store of this block's partial (distinct block per
    # grid step -> compatible with "parallel" dimension semantics).
    out_ref[...] = jnp.full(out_ref.shape, partial, dtype=jnp.float32)


def _round_up(x, m):
    return (x + m - 1) // m * m


def _choose_batch_tile(B, C, bytes_per_elem_both, vmem_input_budget=12 * 1024 * 1024):
    """Largest multiple-of-8 batch tile keeping 2 inputs x 2 buffers under budget."""
    bytes_per_row = 2 * bytes_per_elem_both * C  # double-buffered pred+target rows
    tb = max(8, vmem_input_budget // max(bytes_per_row, 1))
    tb = (tb // 8) * 8
    tb = max(8, min(tb, 1024, _round_up(B, 8)))
    return int(tb)


def my_cross_entropy_loss(pred, target, block_batch=None):
    """pred, target: (B, C). Returns scalar float32 loss (mean over batch)."""
    assert pred.shape == target.shape and pred.ndim == 2
    B, C = pred.shape
    itemsize_both = pred.dtype.itemsize + target.dtype.itemsize
    TB = block_batch if block_batch is not None else _choose_batch_tile(B, C, itemsize_both)
    TB = max(8, (int(TB) // 8) * 8)

    B_pad = _round_up(B, TB)
    if B_pad != B:
        # Zero-padded rows have all-zero targets -> contribute exactly zero.
        pred = jnp.pad(pred, ((0, B_pad - B), (0, 0)))
        target = jnp.pad(target, ((0, B_pad - B), (0, 0)))
    num_blocks = B_pad // TB

    out_bytes = num_blocks * 8 * 128 * 4
    cost = pl.CostEstimate(
        flops=6 * B_pad * C,
        transcendentals=B_pad * C,
        bytes_accessed=B_pad * C * itemsize_both + out_bytes,
    )

    partials = pl.pallas_call(
        _ce_partial_kernel,
        out_shape=jax.ShapeDtypeStruct((num_blocks, 8, 128), jnp.float32),
        grid_spec=pltpu.PrefetchScalarGridSpec(
            num_scalar_prefetch=0,
            grid=(num_blocks,),
            in_specs=[
                pl.BlockSpec((TB, C), lambda i: (i, 0)),
                pl.BlockSpec((TB, C), lambda i: (i, 0)),
            ],
            out_specs=pl.BlockSpec((1, 8, 128), lambda i: (i, 0, 0)),
        ),
        compiler_params=pltpu.CompilerParams(
            dimension_semantics=("parallel",),   # shards batch loop across v7x's 2 TCs
            vmem_limit_bytes=32 * 1024 * 1024,
        ),
        cost_estimate=cost,
    )(pred, target)

    # Tiny host-side (XLA) reduction over per-block partials; mean over ORIGINAL B.
    return -jnp.sum(partials[:, 0, 0]) / jnp.float32(B)


def _ref_loss(pred, target):
    logp = jax.nn.log_softmax(pred.astype(jnp.float32), axis=1)
    return -jnp.sum(target.astype(jnp.float32) * logp) / pred.shape[0]


if __name__ == "__main__":
    key = jax.random.PRNGKey(0)

    # Case 1: small (batch, num_classes) matching the module's expected layout.
    k1, k2, k3, k4 = jax.random.split(key, 4)
    B, C = 8, 32
    pred = jax.random.normal(k1, (B, C), dtype=jnp.float32)
    target = jax.nn.softmax(jax.random.normal(k2, (B, C), dtype=jnp.float32), axis=1)
    loss = jax.block_until_ready(my_cross_entropy_loss(pred, target))
    ref = jax.block_until_ready(_ref_loss(pred, target))
    assert jnp.allclose(loss, ref, atol=1e-5, rtol=1e-5), (loss, ref)

    # Case 2: non-multiple-of-tile batch + multi-block grid (exercises padding,
    # the parallel grid, and the wrapper-side partial reduction).
    B2, C2, TB2 = 50, 128, 16
    pred2 = jax.random.normal(k3, (B2, C2), dtype=jnp.float32)
    target2 = jax.nn.softmax(jax.random.normal(k4, (B2, C2), dtype=jnp.float32), axis=1)
    loss2 = jax.block_until_ready(my_cross_entropy_loss(pred2, target2, block_batch=TB2))
    ref2 = jax.block_until_ready(_ref_loss(pred2, target2))
    assert jnp.allclose(loss2, ref2, atol=1e-5, rtol=1e-5), (loss2, ref2)

    print("KERNEL_OK")
</pallas_src>

<mosaic_0001>
module attributes {stable_mosaic.version = 11 : i64} {
  func.func @_ce_partial_kernel(%arg0: i32, %arg1: memref<8x32xf32, #tpu.memory_space<vmem>>, %arg2: memref<8x32xf32, #tpu.memory_space<vmem>>, %arg3: memref<1x8x128xf32, #tpu.memory_space<vmem>>) attributes {dimension_semantics = [#tpu.dimension_semantics<parallel>], iteration_bounds = array<i64: 1>, scalar_prefetch = 0 : i64, scratch_operands = 0 : i64, tpu.core_type = #tpu.core_type<tc>, window_params = [{transform_indices = @transform_0, window_bounds = array<i64: 8, 32>}, {transform_indices = @transform_1, window_bounds = array<i64: 8, 32>}, {transform_indices = @transform_2, window_bounds = array<i64: 1, 8, 128>}]} {
    %c0 = arith.constant 0 : index
    %c0_0 = arith.constant 0 : index
    %0 = vector.load %arg1[%c0, %c0_0] : memref<8x32xf32, #tpu.memory_space<vmem>>, vector<8x32xf32>
    %c0_1 = arith.constant 0 : index
    %c0_2 = arith.constant 0 : index
    %1 = vector.load %arg2[%c0_1, %c0_2] : memref<8x32xf32, #tpu.memory_space<vmem>>, vector<8x32xf32>
    %cst = arith.constant dense<0xFF800000> : vector<8xf32>
    %2 = vector.multi_reduction <maximumf>, %0, %cst [1] : vector<8x32xf32> to vector<8xf32>
    %3 = vector.shape_cast %2 : vector<8xf32> to vector<8x1xf32>
    %4 = vector.broadcast %3 : vector<8x1xf32> to vector<8x32xf32>
    %5 = arith.subf %0, %4 : vector<8x32xf32>
    %6 = math.exp %5 : vector<8x32xf32>
    %cst_3 = arith.constant dense<0.000000e+00> : vector<8xf32>
    %7 = vector.multi_reduction <add>, %6, %cst_3 [1] : vector<8x32xf32> to vector<8xf32>
    %8 = vector.shape_cast %7 : vector<8xf32> to vector<8x1xf32>
    %9 = math.log %8 : vector<8x1xf32>
    %10 = arith.mulf %1, %5 : vector<8x32xf32>
    %11 = vector.shape_cast %10 : vector<8x32xf32> to vector<1x8x32xf32>
    %cst_4 = arith.constant dense<0.000000e+00> : vector<1xf32>
    %12 = vector.multi_reduction <add>, %11, %cst_4 [1, 2] : vector<1x8x32xf32> to vector<1xf32>
    %13 = vector.shape_cast %12 : vector<1xf32> to vector<1x1x1xf32>
    %14 = vector.extract %13[0, 0, 0] : f32 from vector<1x1x1xf32>
    %cst_5 = arith.constant dense<0.000000e+00> : vector<8xf32>
    %15 = vector.multi_reduction <add>, %1, %cst_5 [1] : vector<8x32xf32> to vector<8xf32>
    %16 = vector.shape_cast %15 : vector<8xf32> to vector<8x1xf32>
    %17 = arith.mulf %9, %16 : vector<8x1xf32>
    %18 = vector.shape_cast %17 : vector<8x1xf32> to vector<1x8x1xf32>
    %cst_6 = arith.constant dense<0.000000e+00> : vector<1xf32>
    %19 = vector.multi_reduction <add>, %18, %cst_6 [1, 2] : vector<1x8x1xf32> to vector<1xf32>
    %20 = vector.shape_cast %19 : vector<1xf32> to vector<1x1x1xf32>
    %21 = vector.extract %20[0, 0, 0] : f32 from vector<1x1x1xf32>
    %22 = arith.subf %14, %21 : f32
    %23 = vector.broadcast %22 : f32 to vector<1x8x128xf32>
    %c0_7 = arith.constant 0 : index
    %c0_8 = arith.constant 0 : index
    %c0_9 = arith.constant 0 : index
    %24 = vector.load %arg3[%c0_7, %c0_8, %c0_9] : memref<1x8x128xf32, #tpu.memory_space<vmem>>, vector<1x8x128xf32>
    tpu.vector_store %arg3[%c0_7, %c0_8, %c0_9], %23 {strides = array<i32>} : memref<1x8x128xf32, #tpu.memory_space<vmem>>, vector<1x8x128xf32>,
    return
  }
  func.func @transform_0(%arg0: i32) -> (i32, i32) {
    %c0_i32 = arith.constant 0 : i32
    %c0_i32_0 = arith.constant 0 : i32
    return %arg0, %c0_i32 : i32, i32
  }
  func.func @transform_1(%arg0: i32) -> (i32, i32) {
    %c0_i32 = arith.constant 0 : i32
    %c0_i32_0 = arith.constant 0 : i32
    return %arg0, %c0_i32 : i32, i32
  }
  func.func @transform_2(%arg0: i32) -> (i32, i32, i32) {
    %c0_i32 = arith.constant 0 : i32
    %c0_i32_0 = arith.constant 0 : i32
    %c0_i32_1 = arith.constant 0 : i32
    return %arg0, %c0_i32, %c0_i32_0 : i32, i32, i32
  }
}

</mosaic_0001>

<llo_original>
// kernel: tpu_custom_call.1
$region0: #{tpu_custom_call.1}
  #allocation0 [shape = 'u32[]', space=smem, size = 0x4, offset = 0x4, fixed_abs, tag = 'smem constant byte address 0x4 - core index']
  #allocation1 [shape = 'u32[144,128]{1,0:T(1,128)}', space=vmem, size = 0x12000, scoped, tag = 'internal scratch']
  %s0 = inlined_call_operand.hbm [shape: f32[8,32], index: 0, kind: input, shape index: {}]
  %s1 = inlined_call_operand.hbm [shape: f32[8,32], index: 1, kind: input, shape index: {}]
  %s2 = inlined_call_operand.hbm [shape: f32[1,8,128], index: 2, kind: output, shape index: {}]
  %s3 = sld [smem:[#allocation0]]
  $region26: #{tpu_custom_call.1} parent=0
    _
  %s5 = ssub.s32 1, %s3
  %s6 = scalar_select 0, %s5, %s3
  $region1: #{tpu_custom_call.1} parent=0
    #allocation2 [shape = 'u8[4096]{0}', space=vmem, size = 0x1000, scoped, tag = 'input window, operand 0, single buffered']
    #allocation3 [shape = 's32[1]{0}', space=sflag, size = 0x4, scoped, tag = 'scoped memory for tpu_custom_call.1']
    #allocation4 [shape = 's32[1]{0}', space=sflag, size = 0x4, scoped, tag = 'scoped memory for tpu_custom_call.1']
    #allocation5 [shape = 'u8[4096]{0}', space=vmem, size = 0x1000, scoped, tag = 'input window, operand 1, single buffered']
    #allocation6 [shape = 's32[1]{0}', space=sflag, size = 0x4, scoped, tag = 'scoped memory for tpu_custom_call.1']
    #allocation7 [shape = 'u8[4096]{0}', space=vmem, size = 0x1000, scoped, tag = 'output window, operand 0, single buffered']
    %7 = vsyncpa [#allocation3], 0
    %8 = vsyncpa [#allocation6], 0
    %9 = vsyncpa [#allocation4], 0
    // Predicated region
    $region2: #{tpu_custom_call.1} parent=1 // pred_check
      _
    $region3: #{tpu_custom_call.1} parent=1 // pred_check_branch
      %11 = sbr.rel (0) target = $region5
    $region4: #{tpu_custom_call.1} parent=1 // pred_region
      %s13 = ssub.s32 128, 128
      %14 = vsyncadd [#allocation3], %s13
      %s16 = sshll.u32 [#allocation2], 4
      %s17 = int_to_ptr.vmem [resolvable:$true] %s16
      %19 = dma.hbm_to_vmem [thread:$0]  %s0, 128, %s17, [#allocation3]
    $region5: #{tpu_custom_call.1} parent=1 // pred_fallthru
      _
    // Predicated region
    $region6: #{tpu_custom_call.1} parent=1 // pred_check
      _
    $region7: #{tpu_custom_call.1} parent=1 // pred_check_branch
      %21 = sbr.rel (0) target = $region9
    $region8: #{tpu_custom_call.1} parent=1 // pred_region
      %s23 = ssub.s32 128, 128
      %24 = vsyncadd [#allocation6], %s23
      %s26 = sshll.u32 [#allocation5], 4
      %s27 = int_to_ptr.vmem [resolvable:$true] %s26
      %29 = dma.hbm_to_vmem [thread:$0]  %s1, 128, %s27, [#allocation6]
    $region9: #{tpu_custom_call.1} parent=1 // pred_fallthru
      _
    // Predicated region
    $region10: #{tpu_custom_call.1} parent=1 // pred_check
      _
    $region11: #{tpu_custom_call.1} parent=1 // pred_check_branch
      %31 = sbr.rel (0) target = $region13
    $region12: #{tpu_custom_call.1} parent=1 // pred_region
      %32 = dma.done [#allocation3], 128
    $region13: #{tpu_custom_call.1} parent=1 // pred_fallthru
      _
    // Predicated region
    $region14: #{tpu_custom_call.1} parent=1 // pred_check
      _
    $region15: #{tpu_custom_call.1} parent=1 // pred_check_branch
      %34 = sbr.rel (0) target = $region17
    $region16: #{tpu_custom_call.1} parent=1 // pred_region
      %35 = dma.done [#allocation6], 128
    $region17: #{tpu_custom_call.1} parent=1 // pred_fallthru
      _
    %v36 = vld [vmem:[#allocation2] sm:$0xff]
    %v37 = vld [vmem:[#allocation5] sm:$0xff]
    %vm38 = vcmask 261120
    %v39 = vsel %vm38, %v36, -inf
    %40 = vmax.xlane.f32.xlu0 %v39
    %v41 = vpop.xlane.xlu0 %40
    %v42 = vsub.f32 %v36, %v41
    %v43 = vmul.f32 %v42, 1.442695
    %v44 = vpow.pop %v43
    %v45 = vsel %vm38, %v44, 0.0
    %46 = vadd.xlane.f32.xlu0 %v45
    %v47 = vpop.xlane.xlu0 %46
    %v48 = vlog2.pop %v47
    %v49 = vmul.f32 %v48, 0.6931472
    %v50 = vmul.f32 %v37, %v42
    %v51 = vsel %vm38, %v50, 0.0
    %52 = vadd.xlane.f32.xlu0 %v51
    %v53 = vpop.xlane.xlu0 %52
    %v54 = vrot.slane %v53, 4
    %v55 = vadd.f32 %v53, %v54
    %v56 = vrot.slane %v55, 2
    %v57 = vadd.f32 %v55, %v56
    %v58 = vrot.slane %v57, 1
    %v59 = vadd.f32 %v57, %v58
    %s60 = vtos %v59
    %v61 = vsel %vm38, %v37, 0.0
    %62 = vadd.xlane.f32.xlu0 %v61
    %v63 = vpop.xlane.xlu0 %62
    %v64 = vmul.f32 %v49, %v63
    %vm65 = vcmask 7168
    %v66 = vsel %vm65, %v64, 0.0
    %67 = vadd.xlane.f32.xlu0 %v66
    %v68 = vpop.xlane.xlu0 %67
    %v69 = vrot.slane %v68, 4
    %v70 = vadd.f32 %v68, %v69
    %v71 = vrot.slane %v70, 2
    %v72 = vadd.f32 %v70, %v71
    %v73 = vrot.slane %v72, 1
    %v74 = vadd.f32 %v72, %v73
    %s75 = vtos %v74
    %s76 = ssub.f32 %s60, %s75
    %v77 = vstv %s76
    %78 = vst [vmem:[#allocation7] sm:$0xff] %v77
    // Predicated region
    $region18: #{tpu_custom_call.1} parent=1 // pred_check
      _
    $region19: #{tpu_custom_call.1} parent=1 // pred_check_branch
      %80 = sbr.rel (0) target = $region21
    $region20: #{tpu_custom_call.1} parent=1 // pred_region
      %s82 = ssub.s32 128, 128
      %83 = vsyncadd [#allocation4], %s82
      %s85 = sshll.u32 [#allocation7], 4
      %s86 = int_to_ptr.vmem [resolvable:$true] %s85
      %88 = dma.vmem_to_hbm [thread:$0]  %s86, 128, %s2, [#allocation4]
    $region21: #{tpu_custom_call.1} parent=1 // pred_fallthru
      _
    // Predicated region
    $region22: #{tpu_custom_call.1} parent=1 // pred_check
      _
    $region23: #{tpu_custom_call.1} parent=1 // pred_check_branch
      %90 = sbr.rel (0) target = $region25
    $region24: #{tpu_custom_call.1} parent=1 // pred_region
      %91 = dma.done [#allocation4], 128
    $region25: #{tpu_custom_call.1} parent=1 // pred_fallthru
      _
    %92 = vsyncpa [#allocation3], 1
    %93 = vsyncpa [#allocation6], 1
    %94 = vsyncpa [#allocation4], 1

</llo_original>
